<compile_context>
chip_gen: v7x
topology: tpu7x:2x2x1
jax: 0.10.0
libtpu: 0.0.40
codegen_flags: <defaults>
</compile_context>

<pallas_src>
import jax
import jax.numpy as jnp
from jax import lax
from jax.experimental import pallas as pl


def rnn_forward(x, w_xh, w_hh, w_hy, b_h, b_y):
    """x: (B, T, D) batch-first, like the PyTorch module. Returns (B, T, O)."""
    B, T, D = x.shape
    H = w_xh.shape[1]
    O = w_hy.shape[1]
    f32 = jnp.float32

    B_pad = ((B + 7) // 8) * 8            # sublane-aligned batch
    D_pad = ((D + 127) // 128) * 128      # lane-dense input features
    H_pad = ((H + 127) // 128) * 128      # lane-dense hidden
    O_pad = ((O + 127) // 128) * 128      # lane-dense output

    # Layout plumbing (pure XLA, outside the kernel).  All padding is ZERO so
    # padded batch rows / hidden lanes never contaminate real results.
    x_tm = jnp.transpose(x, (1, 0, 2)).astype(f32)                    # (T, B, D)
    x_tm = jnp.pad(x_tm, ((0, 0), (0, B_pad - B), (0, D_pad - D)))    # (T, B_pad, D_pad)
    x2d = x_tm.reshape(T * B_pad, D_pad)

    w_xh_p = jnp.pad(w_xh.astype(f32), ((0, D_pad - D), (0, H_pad - H)))
    w_hh_p = jnp.pad(w_hh.astype(f32), ((0, H_pad - H), (0, H_pad - H)))
    b_h_p = jnp.pad(b_h.astype(f32).reshape(1, H), ((0, 0), (0, H_pad - H)))
    w_hy_p = jnp.pad(w_hy.astype(f32), ((0, H_pad - H), (0, O_pad - O)))
    b_y_p = jnp.pad(b_y.astype(f32).reshape(1, O), ((0, 0), (0, O_pad - O)))

    def kernel(x_ref, wxh_ref, whh_ref, bh_ref, why_ref, by_ref, out_ref):
        # (1) Batched input projection for every timestep, bias folded in
        #     (single MXU matmul, off the serial path).
        xproj = (jnp.dot(x_ref[...], wxh_ref[...],
                         preferred_element_type=f32) + bh_ref[...])
        # (T, B_pad, H_pad): each xproj[t] is a whole (8,128)-aligned tile.
        xproj = xproj.reshape(T, B_pad, H_pad)
        whh = whh_ref[...]

        # (2) Sequential recurrence, fully unrolled (T is small and static).
        #     h_t kept in registers; no VMEM scratch round-trip.
        h = jnp.zeros((B_pad, H_pad), f32)
        hs = []
        for t in range(T):
            h = jnp.tanh(xproj[t]
                         + jnp.dot(h, whh, preferred_element_type=f32))
            hs.append(h)
        h_all = jnp.concatenate(hs, axis=0)        # (T*B_pad, H_pad)

        # (3) Batched, lane-dense output head over all timesteps at once.
        out_ref[...] = (jnp.dot(h_all, why_ref[...],
                                preferred_element_type=f32)
                        + by_ref[...]).astype(out_ref.dtype)

    out2d = pl.pallas_call(
        kernel,
        out_shape=jax.ShapeDtypeStruct((T * B_pad, O_pad), f32),
    )(x2d, w_xh_p, w_hh_p, b_h_p, w_hy_p, b_y_p)

    # (T*B_pad, O_pad) -> (B, T, O)
    return out2d.reshape(T, B_pad, O_pad)[:, :B, :O].transpose(1, 0, 2)


def rnn_reference(x, w_xh, w_hh, w_hy, b_h, b_y):
    B, T, D = x.shape
    H = w_xh.shape[1]

    def step(h, x_t):
        h = jnp.tanh(x_t @ w_xh + h @ w_hh + b_h)
        y = h @ w_hy + b_y
        return h, y

    h0 = jnp.zeros((B, H), jnp.float32)
    _, ys = lax.scan(step, h0, jnp.transpose(x, (1, 0, 2)))   # ys: (T, B, O)
    return jnp.transpose(ys, (1, 0, 2))


if __name__ == "__main__":
    # Small shapes consistent with the module: batch=2, seq=8, input=16,
    # hidden=32, output=8.
    B, T, D_in, H, O = 2, 8, 16, 32, 8

    key = jax.random.PRNGKey(0)
    kx, k1, k2, k3, k4, k5 = jax.random.split(key, 6)

    x = jax.random.normal(kx, (B, T, D_in), jnp.float32)
    w_xh = 0.2 * jax.random.normal(k1, (D_in, H), jnp.float32)
    w_hh = 0.2 * jax.random.normal(k2, (H, H), jnp.float32)
    w_hy = 0.2 * jax.random.normal(k3, (H, O), jnp.float32)
    b_h = 0.1 * jax.random.normal(k4, (H,), jnp.float32)
    b_y = 0.1 * jax.random.normal(k5, (O,), jnp.float32)

    out = rnn_forward(x, w_xh, w_hh, w_hy, b_h, b_y)
    out = jax.block_until_ready(out)

    ref = rnn_reference(x, w_xh, w_hh, w_hy, b_h, b_y)
    assert out.shape == (B, T, O), out.shape
    assert jnp.allclose(out, ref, atol=1e-4, rtol=1e-4), \
        float(jnp.max(jnp.abs(out - ref)))

    print("KERNEL_OK")
</pallas_src>

<mosaic_0001>
module attributes {stable_mosaic.version = 11 : i64} {
  func.func @kernel(%arg0: memref<64x128xf32, #tpu.memory_space<vmem>>, %arg1: memref<128x128xf32, #tpu.memory_space<vmem>>, %arg2: memref<128x128xf32, #tpu.memory_space<vmem>>, %arg3: memref<1x128xf32, #tpu.memory_space<vmem>>, %arg4: memref<128x128xf32, #tpu.memory_space<vmem>>, %arg5: memref<1x128xf32, #tpu.memory_space<vmem>>, %arg6: memref<64x128xf32, #tpu.memory_space<vmem>>) attributes {dimension_semantics = [], scalar_prefetch = 0 : i64, scratch_operands = 0 : i64, tpu.core_type = #tpu.core_type<tc>} {
    %c0 = arith.constant 0 : index
    %c0_0 = arith.constant 0 : index
    %0 = vector.load %arg0[%c0, %c0_0] : memref<64x128xf32, #tpu.memory_space<vmem>>, vector<64x128xf32>
    %c0_1 = arith.constant 0 : index
    %c0_2 = arith.constant 0 : index
    %1 = vector.load %arg1[%c0_1, %c0_2] : memref<128x128xf32, #tpu.memory_space<vmem>>, vector<128x128xf32>
    %cst = arith.constant dense<0.000000e+00> : vector<64x128xf32>
    %2 = tpu.matmul %0, %1, %cst {dimension_numbers = #tpu.dot_dimension_numbers<[1], [0], [0], [1], [0, 0, 1, 1], [], []>} : vector<64x128xf32>, vector<128x128xf32>, vector<64x128xf32> -> vector<64x128xf32>
    %c0_3 = arith.constant 0 : index
    %c0_4 = arith.constant 0 : index
    %3 = vector.load %arg3[%c0_3, %c0_4] : memref<1x128xf32, #tpu.memory_space<vmem>>, vector<1x128xf32>
    %4 = vector.broadcast %3 : vector<1x128xf32> to vector<64x128xf32>
    %5 = arith.addf %2, %4 : vector<64x128xf32>
    %6 = vector.shape_cast %5 : vector<64x128xf32> to vector<8x8x128xf32>
    %c0_5 = arith.constant 0 : index
    %c0_6 = arith.constant 0 : index
    %7 = vector.load %arg2[%c0_5, %c0_6] : memref<128x128xf32, #tpu.memory_space<vmem>>, vector<128x128xf32>
    %cst_7 = arith.constant 0.000000e+00 : f32
    %8 = vector.broadcast %cst_7 : f32 to vector<8x128xf32>
    %9 = vector.extract_strided_slice %6 {offsets = [0, 0, 0], sizes = [1, 8, 128], strides = [1, 1, 1]} : vector<8x8x128xf32> to vector<1x8x128xf32>
    %10 = vector.shape_cast %9 : vector<1x8x128xf32> to vector<8x128xf32>
    %cst_8 = arith.constant dense<0.000000e+00> : vector<8x128xf32>
    %11 = tpu.matmul %8, %7, %cst_8 {dimension_numbers = #tpu.dot_dimension_numbers<[1], [0], [0], [1], [0, 0, 1, 1], [], []>} : vector<8x128xf32>, vector<128x128xf32>, vector<8x128xf32> -> vector<8x128xf32>
    %12 = arith.addf %10, %11 : vector<8x128xf32>
    %13 = math.tanh %12 : vector<8x128xf32>
    %14 = vector.extract_strided_slice %6 {offsets = [1, 0, 0], sizes = [1, 8, 128], strides = [1, 1, 1]} : vector<8x8x128xf32> to vector<1x8x128xf32>
    %15 = vector.shape_cast %14 : vector<1x8x128xf32> to vector<8x128xf32>
    %cst_9 = arith.constant dense<0.000000e+00> : vector<8x128xf32>
    %16 = tpu.matmul %13, %7, %cst_9 {dimension_numbers = #tpu.dot_dimension_numbers<[1], [0], [0], [1], [0, 0, 1, 1], [], []>} : vector<8x128xf32>, vector<128x128xf32>, vector<8x128xf32> -> vector<8x128xf32>
    %17 = arith.addf %15, %16 : vector<8x128xf32>
    %18 = math.tanh %17 : vector<8x128xf32>
    %19 = vector.extract_strided_slice %6 {offsets = [2, 0, 0], sizes = [1, 8, 128], strides = [1, 1, 1]} : vector<8x8x128xf32> to vector<1x8x128xf32>
    %20 = vector.shape_cast %19 : vector<1x8x128xf32> to vector<8x128xf32>
    %cst_10 = arith.constant dense<0.000000e+00> : vector<8x128xf32>
    %21 = tpu.matmul %18, %7, %cst_10 {dimension_numbers = #tpu.dot_dimension_numbers<[1], [0], [0], [1], [0, 0, 1, 1], [], []>} : vector<8x128xf32>, vector<128x128xf32>, vector<8x128xf32> -> vector<8x128xf32>
    %22 = arith.addf %20, %21 : vector<8x128xf32>
    %23 = math.tanh %22 : vector<8x128xf32>
    %24 = vector.extract_strided_slice %6 {offsets = [3, 0, 0], sizes = [1, 8, 128], strides = [1, 1, 1]} : vector<8x8x128xf32> to vector<1x8x128xf32>
    %25 = vector.shape_cast %24 : vector<1x8x128xf32> to vector<8x128xf32>
    %cst_11 = arith.constant dense<0.000000e+00> : vector<8x128xf32>
    %26 = tpu.matmul %23, %7, %cst_11 {dimension_numbers = #tpu.dot_dimension_numbers<[1], [0], [0], [1], [0, 0, 1, 1], [], []>} : vector<8x128xf32>, vector<128x128xf32>, vector<8x128xf32> -> vector<8x128xf32>
    %27 = arith.addf %25, %26 : vector<8x128xf32>
    %28 = math.tanh %27 : vector<8x128xf32>
    %29 = vector.extract_strided_slice %6 {offsets = [4, 0, 0], sizes = [1, 8, 128], strides = [1, 1, 1]} : vector<8x8x128xf32> to vector<1x8x128xf32>
    %30 = vector.shape_cast %29 : vector<1x8x128xf32> to vector<8x128xf32>
    %cst_12 = arith.constant dense<0.000000e+00> : vector<8x128xf32>
    %31 = tpu.matmul %28, %7, %cst_12 {dimension_numbers = #tpu.dot_dimension_numbers<[1], [0], [0], [1], [0, 0, 1, 1], [], []>} : vector<8x128xf32>, vector<128x128xf32>, vector<8x128xf32> -> vector<8x128xf32>
    %32 = arith.addf %30, %31 : vector<8x128xf32>
    %33 = math.tanh %32 : vector<8x128xf32>
    %34 = vector.extract_strided_slice %6 {offsets = [5, 0, 0], sizes = [1, 8, 128], strides = [1, 1, 1]} : vector<8x8x128xf32> to vector<1x8x128xf32>
    %35 = vector.shape_cast %34 : vector<1x8x128xf32> to vector<8x128xf32>
    %cst_13 = arith.constant dense<0.000000e+00> : vector<8x128xf32>
    %36 = tpu.matmul %33, %7, %cst_13 {dimension_numbers = #tpu.dot_dimension_numbers<[1], [0], [0], [1], [0, 0, 1, 1], [], []>} : vector<8x128xf32>, vector<128x128xf32>, vector<8x128xf32> -> vector<8x128xf32>
    %37 = arith.addf %35, %36 : vector<8x128xf32>
    %38 = math.tanh %37 : vector<8x128xf32>
    %39 = vector.extract_strided_slice %6 {offsets = [6, 0, 0], sizes = [1, 8, 128], strides = [1, 1, 1]} : vector<8x8x128xf32> to vector<1x8x128xf32>
    %40 = vector.shape_cast %39 : vector<1x8x128xf32> to vector<8x128xf32>
    %cst_14 = arith.constant dense<0.000000e+00> : vector<8x128xf32>
    %41 = tpu.matmul %38, %7, %cst_14 {dimension_numbers = #tpu.dot_dimension_numbers<[1], [0], [0], [1], [0, 0, 1, 1], [], []>} : vector<8x128xf32>, vector<128x128xf32>, vector<8x128xf32> -> vector<8x128xf32>
    %42 = arith.addf %40, %41 : vector<8x128xf32>
    %43 = math.tanh %42 : vector<8x128xf32>
    %44 = vector.extract_strided_slice %6 {offsets = [7, 0, 0], sizes = [1, 8, 128], strides = [1, 1, 1]} : vector<8x8x128xf32> to vector<1x8x128xf32>
    %45 = vector.shape_cast %44 : vector<1x8x128xf32> to vector<8x128xf32>
    %cst_15 = arith.constant dense<0.000000e+00> : vector<8x128xf32>
    %46 = tpu.matmul %43, %7, %cst_15 {dimension_numbers = #tpu.dot_dimension_numbers<[1], [0], [0], [1], [0, 0, 1, 1], [], []>} : vector<8x128xf32>, vector<128x128xf32>, vector<8x128xf32> -> vector<8x128xf32>
    %47 = arith.addf %45, %46 : vector<8x128xf32>
    %48 = math.tanh %47 : vector<8x128xf32>
    %49 = tpu.concatenate %13, %18, %23, %28, %33, %38, %43, %48 in 0 : vector<8x128xf32>, vector<8x128xf32>, vector<8x128xf32>, vector<8x128xf32>, vector<8x128xf32>, vector<8x128xf32>, vector<8x128xf32>, vector<8x128xf32> -> vector<64x128xf32>
    %c0_16 = arith.constant 0 : index
    %c0_17 = arith.constant 0 : index
    %50 = vector.load %arg4[%c0_16, %c0_17] : memref<128x128xf32, #tpu.memory_space<vmem>>, vector<128x128xf32>
    %cst_18 = arith.constant dense<0.000000e+00> : vector<64x128xf32>
    %51 = tpu.matmul %49, %50, %cst_18 {dimension_numbers = #tpu.dot_dimension_numbers<[1], [0], [0], [1], [0, 0, 1, 1], [], []>} : vector<64x128xf32>, vector<128x128xf32>, vector<64x128xf32> -> vector<64x128xf32>
    %c0_19 = arith.constant 0 : index
    %c0_20 = arith.constant 0 : index
    %52 = vector.load %arg5[%c0_19, %c0_20] : memref<1x128xf32, #tpu.memory_space<vmem>>, vector<1x128xf32>
    %53 = vector.broadcast %52 : vector<1x128xf32> to vector<64x128xf32>
    %54 = arith.addf %51, %53 : vector<64x128xf32>
    %c0_21 = arith.constant 0 : index
    %c0_22 = arith.constant 0 : index
    %55 = vector.load %arg6[%c0_21, %c0_22] : memref<64x128xf32, #tpu.memory_space<vmem>>, vector<64x128xf32>
    tpu.vector_store %arg6[%c0_21, %c0_22], %54 {strides = array<i32>} : memref<64x128xf32, #tpu.memory_space<vmem>>, vector<64x128xf32>,
    return
  }
}

</mosaic_0001>

<llo_original>
// kernel: tpu_custom_call.1
$region0: #{tpu_custom_call.1}
  #allocation0 [shape = 'u32[]', space=smem, size = 0x4, offset = 0x4, fixed_abs, tag = 'smem constant byte address 0x4 - core index']
  #allocation1 [shape = 'u32[144,128]{1,0:T(1,128)}', space=vmem, size = 0x12000, scoped, tag = 'internal scratch']
  %s0 = inlined_call_operand.hbm [shape: f32[64,128], index: 0, kind: input, shape index: {}]
  %s1 = inlined_call_operand.hbm [shape: f32[128,128], index: 1, kind: input, shape index: {}]
  %s2 = inlined_call_operand.hbm [shape: f32[128,128], index: 2, kind: input, shape index: {}]
  %s3 = inlined_call_operand.vmem [shape: f32[1,128], index: 3, kind: input, shape index: {}]
  %s4 = inlined_call_operand.hbm [shape: f32[128,128], index: 4, kind: input, shape index: {}]
  %s5 = inlined_call_operand.vmem [shape: f32[1,128], index: 5, kind: input, shape index: {}]
  %s6 = inlined_call_operand.hbm [shape: f32[64,128], index: 6, kind: output, shape index: {}]
  %s7 = sld [smem:[#allocation0]]
  $region50: #{tpu_custom_call.1} parent=0
    _
  %s9 = ssub.s32 1, %s7
  %s10 = scalar_select 0, %s9, %s7
  $region1: #{tpu_custom_call.1} parent=0
    #allocation2 [shape = 'u8[32768]{0}', space=vmem, size = 0x8000, scoped, tag = 'input window, operand 0, single buffered']
    #allocation3 [shape = 's32[1]{0}', space=sflag, size = 0x4, scoped, tag = 'scoped memory for tpu_custom_call.1']
    #allocation4 [shape = 's32[1]{0}', space=sflag, size = 0x4, scoped, tag = 'scoped memory for tpu_custom_call.1']
    #allocation5 [shape = 'u8[65536]{0}', space=vmem, size = 0x10000, scoped, tag = 'input window, operand 1, single buffered']
    #allocation6 [shape = 's32[1]{0}', space=sflag, size = 0x4, scoped, tag = 'scoped memory for tpu_custom_call.1']
    #allocation7 [shape = 'u8[65536]{0}', space=vmem, size = 0x10000, scoped, tag = 'input window, operand 2, single buffered']
    #allocation8 [shape = 'u8[65536]{0}', space=vmem, size = 0x10000, scoped, tag = 'input window, operand 4, single buffered']
    #allocation9 [shape = 's32[1]{0}', space=sflag, size = 0x4, scoped, tag = 'scoped memory for tpu_custom_call.1']
    #allocation10 [shape = 'u8[32768]{0}', space=vmem, size = 0x8000, scoped, tag = 'output window, operand 0, single buffered']
    %11 = vsyncpa [#allocation3], 0
    %12 = vsyncpa [#allocation6], 0
    %13 = vsyncpa [#allocation9], 0
    %14 = vsyncpa [#allocation4], 0
    // Predicated region
    $region2: #{tpu_custom_call.1} parent=1 // pred_check
      _
    $region3: #{tpu_custom_call.1} parent=1 // pred_check_branch
      %16 = sbr.rel (0) target = $region5
    $region4: #{tpu_custom_call.1} parent=1 // pred_region
      %s18 = ssub.s32 1024, 1024
      %19 = vsyncadd [#allocation3], %s18
      %s20 = sshll.u32 [#allocation2], 4
      %s21 = int_to_ptr.vmem [resolvable:$true] %s20
      %26 = dma.hbm_to_vmem [thread:$0]  %s0, 1024, %s21, [#allocation3], 128, 128, 8
    $region5: #{tpu_custom_call.1} parent=1 // pred_fallthru
      _
    // Predicated region
    $region6: #{tpu_custom_call.1} parent=1 // pred_check
      _
    $region7: #{tpu_custom_call.1} parent=1 // pred_check_branch
      %28 = sbr.rel (0) target = $region9
    $region8: #{tpu_custom_call.1} parent=1 // pred_region
      %s30 = ssub.s32 2048, 2048
      %31 = vsyncadd [#allocation6], %s30
      %s32 = sshll.u32 [#allocation5], 4
      %s33 = int_to_ptr.vmem [resolvable:$true] %s32
      %38 = dma.hbm_to_vmem [thread:$0]  %s1, 2048, %s33, [#allocation6], 128, 128, 8
    $region9: #{tpu_custom_call.1} parent=1 // pred_fallthru
      _
    // Predicated region
    $region10: #{tpu_custom_call.1} parent=1 // pred_check
      _
    $region11: #{tpu_custom_call.1} parent=1 // pred_check_branch
      %40 = sbr.rel (0) target = $region13
    $region12: #{tpu_custom_call.1} parent=1 // pred_region
      %s42 = ssub.s32 2048, 2048
      %43 = vsyncadd [#allocation6], %s42
      %s44 = sshll.u32 [#allocation7], 4
      %s45 = int_to_ptr.vmem [resolvable:$true] %s44
      %50 = dma.hbm_to_vmem [thread:$0]  %s2, 2048, %s45, [#allocation6], 128, 128, 8
    $region13: #{tpu_custom_call.1} parent=1 // pred_fallthru
      _
    // Predicated region
    $region14: #{tpu_custom_call.1} parent=1 // pred_check
      _
    $region15: #{tpu_custom_call.1} parent=1 // pred_check_branch
      %52 = sbr.rel (0) target = $region17
    $region16: #{tpu_custom_call.1} parent=1 // pred_region
      _
    $region17: #{tpu_custom_call.1} parent=1 // pred_fallthru
      _
    // Predicated region
    $region18: #{tpu_custom_call.1} parent=1 // pred_check
      _
    $region19: #{tpu_custom_call.1} parent=1 // pred_check_branch
      %54 = sbr.rel (0) target = $region21
    $region20: #{tpu_custom_call.1} parent=1 // pred_region
      %s56 = ssub.s32 2048, 2048
      %57 = vsyncadd [#allocation9], %s56
      %s58 = sshll.u32 [#allocation8], 4
      %s59 = int_to_ptr.vmem [resolvable:$true] %s58
      %64 = dma.hbm_to_vmem [thread:$0]  %s4, 2048, %s59, [#allocation9], 128, 128, 8
    $region21: #{tpu_custom_call.1} parent=1 // pred_fallthru
      _
    // Predicated region
    $region22: #{tpu_custom_call.1} parent=1 // pred_check
      _
    $region23: #{tpu_custom_call.1} parent=1 // pred_check_branch
      %66 = sbr.rel (0) target = $region25
    $region24: #{tpu_custom_call.1} parent=1 // pred_region
      _
    $region25: #{tpu_custom_call.1} parent=1 // pred_fallthru
      _
    // Predicated region
    $region26: #{tpu_custom_call.1} parent=1 // pred_check
      _
    $region27: #{tpu_custom_call.1} parent=1 // pred_check_branch
      %68 = sbr.rel (0) target = $region29
    $region28: #{tpu_custom_call.1} parent=1 // pred_region
      %69 = dma.done [#allocation3], 1024
    $region29: #{tpu_custom_call.1} parent=1 // pred_fallthru
      _
    // Predicated region
    $region30: #{tpu_custom_call.1} parent=1 // pred_check
      _
    $region31: #{tpu_custom_call.1} parent=1 // pred_check_branch
      %71 = sbr.rel (0) target = $region33
    $region32: #{tpu_custom_call.1} parent=1 // pred_region
      %72 = dma.done [#allocation6], 2048
    $region33: #{tpu_custom_call.1} parent=1 // pred_fallthru
      _
    // Predicated region
    $region34: #{tpu_custom_call.1} parent=1 // pred_check
      _
    $region35: #{tpu_custom_call.1} parent=1 // pred_check_branch
      %74 = sbr.rel (0) target = $region37
    $region36: #{tpu_custom_call.1} parent=1 // pred_region
      %75 = dma.done [#allocation6], 2048
    $region37: #{tpu_custom_call.1} parent=1 // pred_fallthru
      _
    // Predicated region
    $region38: #{tpu_custom_call.1} parent=1 // pred_check
      _
    $region39: #{tpu_custom_call.1} parent=1 // pred_check_branch
      %77 = sbr.rel (0) target = $region41
    $region40: #{tpu_custom_call.1} parent=1 // pred_region
      %78 = dma.done [#allocation9], 2048
    $region41: #{tpu_custom_call.1} parent=1 // pred_fallthru
      _
    %v79 = vld [vmem:[#allocation2] sm:$0xff]
    %v80 = vld [vmem:[#allocation2 + $0x8] sm:$0xff]
    %v81 = vld [vmem:[#allocation2 + $0x10] sm:$0xff]
    %v82 = vld [vmem:[#allocation2 + $0x18] sm:$0xff]
    %v83 = vld [vmem:[#allocation2 + $0x20] sm:$0xff]
    %v84 = vld [vmem:[#allocation2 + $0x28] sm:$0xff]
    %v85 = vld [vmem:[#allocation2 + $0x30] sm:$0xff]
    %v86 = vld [vmem:[#allocation2 + $0x38] sm:$0xff]
    %v87 = vld [vmem:[#allocation5] sm:$0xff]
    %v88 = vld [vmem:[#allocation5 + $0x8] sm:$0xff]
    %v89 = vld [vmem:[#allocation5 + $0x10] sm:$0xff]
    %v90 = vld [vmem:[#allocation5 + $0x18] sm:$0xff]
    %v91 = vld [vmem:[#allocation5 + $0x20] sm:$0xff]
    %v92 = vld [vmem:[#allocation5 + $0x28] sm:$0xff]
    %v93 = vld [vmem:[#allocation5 + $0x30] sm:$0xff]
    %v94 = vld [vmem:[#allocation5 + $0x38] sm:$0xff]
    %v95 = vld [vmem:[#allocation5 + $0x40] sm:$0xff]
    %v96 = vld [vmem:[#allocation5 + $0x48] sm:$0xff]
    %v97 = vld [vmem:[#allocation5 + $0x50] sm:$0xff]
    %v98 = vld [vmem:[#allocation5 + $0x58] sm:$0xff]
    %v99 = vld [vmem:[#allocation5 + $0x60] sm:$0xff]
    %v100 = vld [vmem:[#allocation5 + $0x68] sm:$0xff]
    %v101 = vld [vmem:[#allocation5 + $0x70] sm:$0xff]
    %v102 = vld [vmem:[#allocation5 + $0x78] sm:$0xff]
    %v103 = vld [vmem:[%s3] sm:$0x1]
    %v105 = vlaneseq
    %v106 = vshrl.u32 %v105, 7
    %v107 = vsub.s32 0, %v106
    %v108 = vrot.slane %v103, %v107
    %110 = vmatprep.subr.mxu0 0.0
    %111 = vmatpush1.msra.mxu0 %v87
    %112 = vmatprep.subr.mxu0 0.0
    %113 = vmatpush1.msra.mxu0 %v88
    %114 = vmatprep.subr.mxu0 0.0
    %115 = vmatpush1.msra.mxu0 %v89
    %116 = vmatprep.subr.mxu0 0.0
    %117 = vmatpush1.msra.mxu0 %v90
    %118 = vmatprep.subr.mxu0 0.0
    %119 = vmatpush1.msra.mxu0 %v91
    %120 = vmatprep.subr.mxu0 0.0
    %121 = vmatpush1.msra.mxu0 %v92
    %122 = vmatprep.subr.mxu0 0.0
    %123 = vmatpush1.msra.mxu0 %v93
    %124 = vmatprep.subr.mxu0 0.0
    %125 = vmatpush1.msra.mxu0 %v94
    %126 = vmatprep.subr.mxu0 0.0
    %127 = vmatpush1.msra.mxu0 %v95
    %128 = vmatprep.subr.mxu0 0.0
    %129 = vmatpush1.msra.mxu0 %v96
    %130 = vmatprep.subr.mxu0 0.0
    %131 = vmatpush1.msra.mxu0 %v97
    %132 = vmatprep.subr.mxu0 0.0
    %133 = vmatpush1.msra.mxu0 %v98
    %134 = vmatprep.subr.mxu0 0.0
    %135 = vmatpush1.msra.mxu0 %v99
    %136 = vmatprep.subr.mxu0 0.0
    %137 = vmatpush1.msra.mxu0 %v100
    %138 = vmatprep.subr.mxu0 0.0
    %139 = vmatpush1.msra.mxu0 %v101
    %140 = vmatprep.subr.mxu0 0.0
    %141 = vmatpush1.msra.mxu0 %v102
    %142 = vmatprep.subr.mxu0 0.0
    %143 = vmatpush1.msra.mxu0 0.0
    %144 = vmatprep.subr.mxu0 0.0
    %145 = vmatpush1.msra.mxu0 0.0
    %146 = vmatprep.subr.mxu0 0.0
    %147 = vmatpush1.msra.mxu0 0.0
    %148 = vmatprep.subr.mxu0 0.0
    %149 = vmatpush1.msra.mxu0 0.0
    %150 = vmatprep.subr.mxu0 0.0
    %151 = vmatpush1.msra.mxu0 0.0
    %152 = vmatprep.subr.mxu0 0.0
    %153 = vmatpush1.msra.mxu0 0.0
    %154 = vmatprep.subr.mxu0 0.0
    %155 = vmatpush1.msra.mxu0 0.0
    %156 = vmatprep.subr.mxu0 0.0
    %157 = vmatpush1.msra.mxu0 0.0
    %158 = vmatprep.subr.mxu0 0.0
    %159 = vmatpush1.msra.mxu0 0.0
    %160 = vmatprep.subr.mxu0 0.0
    %161 = vmatpush1.msra.mxu0 0.0
    %162 = vmatprep.subr.mxu0 0.0
    %163 = vmatpush1.msra.mxu0 0.0
    %164 = vmatprep.subr.mxu0 0.0
    %165 = vmatpush1.msra.mxu0 0.0
    %166 = vmatprep.subr.mxu0 0.0
    %167 = vmatpush1.msra.mxu0 0.0
    %168 = vmatprep.subr.mxu0 0.0
    %169 = vmatpush1.msra.mxu0 0.0
    %170 = vmatprep.subr.mxu0 0.0
    %171 = vmatpush1.msra.mxu0 0.0
    %172 = vmatprep.subr.mxu0 0.0
    %173 = vmatpush1.msra.mxu0 0.0
    %174 = vmatprep.mubr.f32.mxu0 0.0
    %175 = vmatmul.mubr.f32.gmra.mrb[0].mxu0 %v79
    %v176 = vpop.f32.mrb[0].mxu0
    %v177 = vadd.f32 %v108, %v176
    %v178 = vpop.f32.mrb[0].mxu0
    %179 = vmatprep.mubr.f32.mxu0 0.0
    %180 = vmatmul.mubr.f32.gmra.mrb[0].mxu0 %v80
    %v181 = vpop.f32.mrb[0].mxu0
    %v182 = vadd.f32 %v108, %v181
    %v183 = vpop.f32.mrb[0].mxu0
    %184 = vmatprep.mubr.f32.mxu0 0.0
    %185 = vmatmul.mubr.f32.gmra.mrb[0].mxu0 %v81
    %v186 = vpop.f32.mrb[0].mxu0
    %v187 = vadd.f32 %v108, %v186
    %v188 = vpop.f32.mrb[0].mxu0
    %189 = vmatprep.mubr.f32.mxu0 0.0
    %190 = vmatmul.mubr.f32.gmra.mrb[0].mxu0 %v82
    %v191 = vpop.f32.mrb[0].mxu0
    %v192 = vadd.f32 %v108, %v191
    %v193 = vpop.f32.mrb[0].mxu0
    %194 = vmatprep.mubr.f32.mxu0 0.0
    %195 = vmatmul.mubr.f32.gmra.mrb[0].mxu0 %v83
    %v196 = vpop.f32.mrb[0].mxu0
    %v197 = vadd.f32 %v108, %v196
    %v198 = vpop.f32.mrb[0].mxu0
    %199 = vmatprep.mubr.f32.mxu0 0.0
    %200 = vmatmul.mubr.f32.gmra.mrb[0].mxu0 %v84
    %v201 = vpop.f32.mrb[0].mxu0
    %v202 = vadd.f32 %v108, %v201
    %v203 = vpop.f32.mrb[0].mxu0
    %204 = vmatprep.mubr.f32.mxu0 0.0
    %205 = vmatmul.mubr.f32.gmra.mrb[0].mxu0 %v85
    %v206 = vpop.f32.mrb[0].mxu0
    %v207 = vadd.f32 %v108, %v206
    %v208 = vpop.f32.mrb[0].mxu0
    %209 = vmatprep.mubr.f32.mxu0 0.0
    %210 = vmatmul.mubr.f32.gmra.mrb[0].mxu0 %v86
    %v211 = vpop.f32.mrb[0].mxu0
    %v212 = vadd.f32 %v108, %v211
    %v213 = vpop.f32.mrb[0].mxu0
    %214 = vdwg.mxu0
    %v215 = vld [vmem:[#allocation7] sm:$0xff]
    %v216 = vld [vmem:[#allocation7 + $0x8] sm:$0xff]
    %v217 = vld [vmem:[#allocation7 + $0x10] sm:$0xff]
    %v218 = vld [vmem:[#allocation7 + $0x18] sm:$0xff]
    %v219 = vld [vmem:[#allocation7 + $0x20] sm:$0xff]
    %v220 = vld [vmem:[#allocation7 + $0x28] sm:$0xff]
    %v221 = vld [vmem:[#allocation7 + $0x30] sm:$0xff]
    %v222 = vld [vmem:[#allocation7 + $0x38] sm:$0xff]
    %v223 = vld [vmem:[#allocation7 + $0x40] sm:$0xff]
    %v224 = vld [vmem:[#allocation7 + $0x48] sm:$0xff]
    %v225 = vld [vmem:[#allocation7 + $0x50] sm:$0xff]
    %v226 = vld [vmem:[#allocation7 + $0x58] sm:$0xff]
    %v227 = vld [vmem:[#allocation7 + $0x60] sm:$0xff]
    %v228 = vld [vmem:[#allocation7 + $0x68] sm:$0xff]
    %v229 = vld [vmem:[#allocation7 + $0x70] sm:$0xff]
    %v230 = vld [vmem:[#allocation7 + $0x78] sm:$0xff]
    %231 = vmatprep.subr.mxu0 0.0
    %232 = vmatpush1.msra.mxu0 %v215
    %233 = vmatprep.subr.mxu0 0.0
    %234 = vmatpush1.msra.mxu0 %v216
    %235 = vmatprep.subr.mxu0 0.0
    %236 = vmatpush1.msra.mxu0 %v217
    %237 = vmatprep.subr.mxu0 0.0
    %238 = vmatpush1.msra.mxu0 %v218
    %239 = vmatprep.subr.mxu0 0.0
    %240 = vmatpush1.msra.mxu0 %v219
    %241 = vmatprep.subr.mxu0 0.0
    %242 = vmatpush1.msra.mxu0 %v220
    %243 = vmatprep.subr.mxu0 0.0
    %244 = vmatpush1.msra.mxu0 %v221
    %245 = vmatprep.subr.mxu0 0.0
    %246 = vmatpush1.msra.mxu0 %v222
    %247 = vmatprep.subr.mxu0 0.0
    %248 = vmatpush1.msra.mxu0 %v223
    %249 = vmatprep.subr.mxu0 0.0
    %250 = vmatpush1.msra.mxu0 %v224
    %251 = vmatprep.subr.mxu0 0.0
    %252 = vmatpush1.msra.mxu0 %v225
    %253 = vmatprep.subr.mxu0 0.0
    %254 = vmatpush1.msra.mxu0 %v226
    %255 = vmatprep.subr.mxu0 0.0
    %256 = vmatpush1.msra.mxu0 %v227
    %257 = vmatprep.subr.mxu0 0.0
    %258 = vmatpush1.msra.mxu0 %v228
    %259 = vmatprep.subr.mxu0 0.0
    %260 = vmatpush1.msra.mxu0 %v229
    %261 = vmatprep.subr.mxu0 0.0
    %262 = vmatpush1.msra.mxu0 %v230
    %263 = vmatprep.subr.mxu0 0.0
    %264 = vmatpush1.msra.mxu0 0.0
    %265 = vmatprep.subr.mxu0 0.0
    %266 = vmatpush1.msra.mxu0 0.0
    %267 = vmatprep.subr.mxu0 0.0
    %268 = vmatpush1.msra.mxu0 0.0
    %269 = vmatprep.subr.mxu0 0.0
    %270 = vmatpush1.msra.mxu0 0.0
    %271 = vmatprep.subr.mxu0 0.0
    %272 = vmatpush1.msra.mxu0 0.0
    %273 = vmatprep.subr.mxu0 0.0
    %274 = vmatpush1.msra.mxu0 0.0
    %275 = vmatprep.subr.mxu0 0.0
    %276 = vmatpush1.msra.mxu0 0.0
    %277 = vmatprep.subr.mxu0 0.0
    %278 = vmatpush1.msra.mxu0 0.0
    %279 = vmatprep.subr.mxu0 0.0
    %280 = vmatpush1.msra.mxu0 0.0
    %281 = vmatprep.subr.mxu0 0.0
    %282 = vmatpush1.msra.mxu0 0.0
    %283 = vmatprep.subr.mxu0 0.0
    %284 = vmatpush1.msra.mxu0 0.0
    %285 = vmatprep.subr.mxu0 0.0
    %286 = vmatpush1.msra.mxu0 0.0
    %287 = vmatprep.subr.mxu0 0.0
    %288 = vmatpush1.msra.mxu0 0.0
    %289 = vmatprep.subr.mxu0 0.0
    %290 = vmatpush1.msra.mxu0 0.0
    %291 = vmatprep.subr.mxu0 0.0
    %292 = vmatpush1.msra.mxu0 0.0
    %293 = vmatprep.subr.mxu0 0.0
    %294 = vmatpush1.msra.mxu0 0.0
    %295 = vmatprep.mubr.f32.mxu0 0.0
    %296 = vmatmul.mubr.f32.gmra.mrb[0].mxu0 0.0
    %v297 = vpop.f32.mrb[0].mxu0
    %v298 = vadd.f32 0.0, %v297
    %v299 = vpop.f32.mrb[0].mxu0
    %300 = vdwg.mxu0
    %v301 = vadd.f32 %v177, %v298
    %v302 = vtanh.pop %v301
    %303 = vmatprep.subr.mxu0 0.0
    %304 = vmatpush1.msra.mxu0 %v215
    %305 = vmatprep.subr.mxu0 0.0
    %306 = vmatpush1.msra.mxu0 %v216
    %307 = vmatprep.subr.mxu0 0.0
    %308 = vmatpush1.msra.mxu0 %v217
    %309 = vmatprep.subr.mxu0 0.0
    %310 = vmatpush1.msra.mxu0 %v218
    %311 = vmatprep.subr.mxu0 0.0
    %312 = vmatpush1.msra.mxu0 %v219
    %313 = vmatprep.subr.mxu0 0.0
    %314 = vmatpush1.msra.mxu0 %v220
    %315 = vmatprep.subr.mxu0 0.0
    %316 = vmatpush1.msra.mxu0 %v221
    %317 = vmatprep.subr.mxu0 0.0
    %318 = vmatpush1.msra.mxu0 %v222
    %319 = vmatprep.subr.mxu0 0.0
    %320 = vmatpush1.msra.mxu0 %v223
    %321 = vmatprep.subr.mxu0 0.0
    %322 = vmatpush1.msra.mxu0 %v224
    %323 = vmatprep.subr.mxu0 0.0
    %324 = vmatpush1.msra.mxu0 %v225
    %325 = vmatprep.subr.mxu0 0.0
    %326 = vmatpush1.msra.mxu0 %v226
    %327 = vmatprep.subr.mxu0 0.0
    %328 = vmatpush1.msra.mxu0 %v227
    %329 = vmatprep.subr.mxu0 0.0
    %330 = vmatpush1.msra.mxu0 %v228
    %331 = vmatprep.subr.mxu0 0.0
    %332 = vmatpush1.msra.mxu0 %v229
    %333 = vmatprep.subr.mxu0 0.0
    %334 = vmatpush1.msra.mxu0 %v230
    %335 = vmatprep.subr.mxu0 0.0
    %336 = vmatpush1.msra.mxu0 0.0
    %337 = vmatprep.subr.mxu0 0.0
    %338 = vmatpush1.msra.mxu0 0.0
    %339 = vmatprep.subr.mxu0 0.0
    %340 = vmatpush1.msra.mxu0 0.0
    %341 = vmatprep.subr.mxu0 0.0
    %342 = vmatpush1.msra.mxu0 0.0
    %343 = vmatprep.subr.mxu0 0.0
    %344 = vmatpush1.msra.mxu0 0.0
    %345 = vmatprep.subr.mxu0 0.0
    %346 = vmatpush1.msra.mxu0 0.0
    %347 = vmatprep.subr.mxu0 0.0
    %348 = vmatpush1.msra.mxu0 0.0
    %349 = vmatprep.subr.mxu0 0.0
    %350 = vmatpush1.msra.mxu0 0.0
    %351 = vmatprep.subr.mxu0 0.0
    %352 = vmatpush1.msra.mxu0 0.0
    %353 = vmatprep.subr.mxu0 0.0
    %354 = vmatpush1.msra.mxu0 0.0
    %355 = vmatprep.subr.mxu0 0.0
    %356 = vmatpush1.msra.mxu0 0.0
    %357 = vmatprep.subr.mxu0 0.0
    %358 = vmatpush1.msra.mxu0 0.0
    %359 = vmatprep.subr.mxu0 0.0
    %360 = vmatpush1.msra.mxu0 0.0
    %361 = vmatprep.subr.mxu0 0.0
    %362 = vmatpush1.msra.mxu0 0.0
    %363 = vmatprep.subr.mxu0 0.0
    %364 = vmatpush1.msra.mxu0 0.0
    %365 = vmatprep.subr.mxu0 0.0
    %366 = vmatpush1.msra.mxu0 0.0
    %367 = vmatprep.mubr.f32.mxu0 0.0
    %368 = vmatmul.mubr.f32.gmra.mrb[0].mxu0 %v302
    %v369 = vpop.f32.mrb[0].mxu0
    %v370 = vadd.f32 0.0, %v369
    %v371 = vpop.f32.mrb[0].mxu0
    %372 = vdwg.mxu0
    %v373 = vadd.f32 %v182, %v370
    %v374 = vtanh.pop %v373
    %375 = vmatprep.subr.mxu0 0.0
    %376 = vmatpush1.msra.mxu0 %v215
    %377 = vmatprep.subr.mxu0 0.0
    %378 = vmatpush1.msra.mxu0 %v216
    %379 = vmatprep.subr.mxu0 0.0
    %380 = vmatpush1.msra.mxu0 %v217
    %381 = vmatprep.subr.mxu0 0.0
    %382 = vmatpush1.msra.mxu0 %v218
    %383 = vmatprep.subr.mxu0 0.0
    %384 = vmatpush1.msra.mxu0 %v219
    %385 = vmatprep.subr.mxu0 0.0
    %386 = vmatpush1.msra.mxu0 %v220
    %387 = vmatprep.subr.mxu0 0.0
    %388 = vmatpush1.msra.mxu0 %v221
    %389 = vmatprep.subr.mxu0 0.0
    %390 = vmatpush1.msra.mxu0 %v222
    %391 = vmatprep.subr.mxu0 0.0
    %392 = vmatpush1.msra.mxu0 %v223
    %393 = vmatprep.subr.mxu0 0.0
    %394 = vmatpush1.msra.mxu0 %v224
    %395 = vmatprep.subr.mxu0 0.0
    %396 = vmatpush1.msra.mxu0 %v225
    %397 = vmatprep.subr.mxu0 0.0
    %398 = vmatpush1.msra.mxu0 %v226
    %399 = vmatprep.subr.mxu0 0.0
    %400 = vmatpush1.msra.mxu0 %v227
    %401 = vmatprep.subr.mxu0 0.0
    %402 = vmatpush1.msra.mxu0 %v228
    %403 = vmatprep.subr.mxu0 0.0
    %404 = vmatpush1.msra.mxu0 %v229
    %405 = vmatprep.subr.mxu0 0.0
    %406 = vmatpush1.msra.mxu0 %v230
    %407 = vmatprep.subr.mxu0 0.0
    %408 = vmatpush1.msra.mxu0 0.0
    %409 = vmatprep.subr.mxu0 0.0
    %410 = vmatpush1.msra.mxu0 0.0
    %411 = vmatprep.subr.mxu0 0.0
    %412 = vmatpush1.msra.mxu0 0.0
    %413 = vmatprep.subr.mxu0 0.0
    %414 = vmatpush1.msra.mxu0 0.0
    %415 = vmatprep.subr.mxu0 0.0
    %416 = vmatpush1.msra.mxu0 0.0
    %417 = vmatprep.subr.mxu0 0.0
    %418 = vmatpush1.msra.mxu0 0.0
    %419 = vmatprep.subr.mxu0 0.0
    %420 = vmatpush1.msra.mxu0 0.0
    %421 = vmatprep.subr.mxu0 0.0
    %422 = vmatpush1.msra.mxu0 0.0
    %423 = vmatprep.subr.mxu0 0.0
    %424 = vmatpush1.msra.mxu0 0.0
    %425 = vmatprep.subr.mxu0 0.0
    %426 = vmatpush1.msra.mxu0 0.0
    %427 = vmatprep.subr.mxu0 0.0
    %428 = vmatpush1.msra.mxu0 0.0
    %429 = vmatprep.subr.mxu0 0.0
    %430 = vmatpush1.msra.mxu0 0.0
    %431 = vmatprep.subr.mxu0 0.0
    %432 = vmatpush1.msra.mxu0 0.0
    %433 = vmatprep.subr.mxu0 0.0
    %434 = vmatpush1.msra.mxu0 0.0
    %435 = vmatprep.subr.mxu0 0.0
    %436 = vmatpush1.msra.mxu0 0.0
    %437 = vmatprep.subr.mxu0 0.0
    %438 = vmatpush1.msra.mxu0 0.0
    %439 = vmatprep.mubr.f32.mxu0 0.0
    %440 = vmatmul.mubr.f32.gmra.mrb[0].mxu0 %v374
    %v441 = vpop.f32.mrb[0].mxu0
    %v442 = vadd.f32 0.0, %v441
    %v443 = vpop.f32.mrb[0].mxu0
    %444 = vdwg.mxu0
    %v445 = vadd.f32 %v187, %v442
    %v446 = vtanh.pop %v445
    %447 = vmatprep.subr.mxu0 0.0
    %448 = vmatpush1.msra.mxu0 %v215
    %449 = vmatprep.subr.mxu0 0.0
    %450 = vmatpush1.msra.mxu0 %v216
    %451 = vmatprep.subr.mxu0 0.0
    %452 = vmatpush1.msra.mxu0 %v217
    %453 = vmatprep.subr.mxu0 0.0
    %454 = vmatpush1.msra.mxu0 %v218
    %455 = vmatprep.subr.mxu0 0.0
    %456 = vmatpush1.msra.mxu0 %v219
    %457 = vmatprep.subr.mxu0 0.0
    %458 = vmatpush1.msra.mxu0 %v220
    %459 = vmatprep.subr.mxu0 0.0
    %460 = vmatpush1.msra.mxu0 %v221
    %461 = vmatprep.subr.mxu0 0.0
    %462 = vmatpush1.msra.mxu0 %v222
    %463 = vmatprep.subr.mxu0 0.0
    %464 = vmatpush1.msra.mxu0 %v223
    %465 = vmatprep.subr.mxu0 0.0
    %466 = vmatpush1.msra.mxu0 %v224
    %467 = vmatprep.subr.mxu0 0.0
    %468 = vmatpush1.msra.mxu0 %v225
    %469 = vmatprep.subr.mxu0 0.0
    %470 = vmatpush1.msra.mxu0 %v226
    %471 = vmatprep.subr.mxu0 0.0
    %472 = vmatpush1.msra.mxu0 %v227
    %473 = vmatprep.subr.mxu0 0.0
    %474 = vmatpush1.msra.mxu0 %v228
    %475 = vmatprep.subr.mxu0 0.0
    %476 = vmatpush1.msra.mxu0 %v229
    %477 = vmatprep.subr.mxu0 0.0
    %478 = vmatpush1.msra.mxu0 %v230
    %479 = vmatprep.subr.mxu0 0.0
    %480 = vmatpush1.msra.mxu0 0.0
    %481 = vmatprep.subr.mxu0 0.0
    %482 = vmatpush1.msra.mxu0 0.0
    %483 = vmatprep.subr.mxu0 0.0
    %484 = vmatpush1.msra.mxu0 0.0
    %485 = vmatprep.subr.mxu0 0.0
    %486 = vmatpush1.msra.mxu0 0.0
    %487 = vmatprep.subr.mxu0 0.0
    %488 = vmatpush1.msra.mxu0 0.0
    %489 = vmatprep.subr.mxu0 0.0
    %490 = vmatpush1.msra.mxu0 0.0
    %491 = vmatprep.subr.mxu0 0.0
    %492 = vmatpush1.msra.mxu0 0.0
    %493 = vmatprep.subr.mxu0 0.0
    %494 = vmatpush1.msra.mxu0 0.0
    %495 = vmatprep.subr.mxu0 0.0
    %496 = vmatpush1.msra.mxu0 0.0
    %497 = vmatprep.subr.mxu0 0.0
    %498 = vmatpush1.msra.mxu0 0.0
    %499 = vmatprep.subr.mxu0 0.0
    %500 = vmatpush1.msra.mxu0 0.0
    %501 = vmatprep.subr.mxu0 0.0
    %502 = vmatpush1.msra.mxu0 0.0
    %503 = vmatprep.subr.mxu0 0.0
    %504 = vmatpush1.msra.mxu0 0.0
    %505 = vmatprep.subr.mxu0 0.0
    %506 = vmatpush1.msra.mxu0 0.0
    %507 = vmatprep.subr.mxu0 0.0
    %508 = vmatpush1.msra.mxu0 0.0
    %509 = vmatprep.subr.mxu0 0.0
    %510 = vmatpush1.msra.mxu0 0.0
    %511 = vmatprep.mubr.f32.mxu0 0.0
    %512 = vmatmul.mubr.f32.gmra.mrb[0].mxu0 %v446
    %v513 = vpop.f32.mrb[0].mxu0
    %v514 = vadd.f32 0.0, %v513
    %v515 = vpop.f32.mrb[0].mxu0
    %516 = vdwg.mxu0
    %v517 = vadd.f32 %v192, %v514
    %v518 = vtanh.pop %v517
    %519 = vmatprep.subr.mxu0 0.0
    %520 = vmatpush1.msra.mxu0 %v215
    %521 = vmatprep.subr.mxu0 0.0
    %522 = vmatpush1.msra.mxu0 %v216
    %523 = vmatprep.subr.mxu0 0.0
    %524 = vmatpush1.msra.mxu0 %v217
    %525 = vmatprep.subr.mxu0 0.0
    %526 = vmatpush1.msra.mxu0 %v218
    %527 = vmatprep.subr.mxu0 0.0
    %528 = vmatpush1.msra.mxu0 %v219
    %529 = vmatprep.subr.mxu0 0.0
    %530 = vmatpush1.msra.mxu0 %v220
    %531 = vmatprep.subr.mxu0 0.0
    %532 = vmatpush1.msra.mxu0 %v221
    %533 = vmatprep.subr.mxu0 0.0
    %534 = vmatpush1.msra.mxu0 %v222
    %535 = vmatprep.subr.mxu0 0.0
    %536 = vmatpush1.msra.mxu0 %v223
    %537 = vmatprep.subr.mxu0 0.0
    %538 = vmatpush1.msra.mxu0 %v224
    %539 = vmatprep.subr.mxu0 0.0
    %540 = vmatpush1.msra.mxu0 %v225
    %541 = vmatprep.subr.mxu0 0.0
    %542 = vmatpush1.msra.mxu0 %v226
    %543 = vmatprep.subr.mxu0 0.0
    %544 = vmatpush1.msra.mxu0 %v227
    %545 = vmatprep.subr.mxu0 0.0
    %546 = vmatpush1.msra.mxu0 %v228
    %547 = vmatprep.subr.mxu0 0.0
    %548 = vmatpush1.msra.mxu0 %v229
    %549 = vmatprep.subr.mxu0 0.0
    %550 = vmatpush1.msra.mxu0 %v230
    %551 = vmatprep.subr.mxu0 0.0
    %552 = vmatpush1.msra.mxu0 0.0
    %553 = vmatprep.subr.mxu0 0.0
    %554 = vmatpush1.msra.mxu0 0.0
    %555 = vmatprep.subr.mxu0 0.0
    %556 = vmatpush1.msra.mxu0 0.0
    %557 = vmatprep.subr.mxu0 0.0
    %558 = vmatpush1.msra.mxu0 0.0
    %559 = vmatprep.subr.mxu0 0.0
    %560 = vmatpush1.msra.mxu0 0.0
    %561 = vmatprep.subr.mxu0 0.0
    %562 = vmatpush1.msra.mxu0 0.0
    %563 = vmatprep.subr.mxu0 0.0
    %564 = vmatpush1.msra.mxu0 0.0
    %565 = vmatprep.subr.mxu0 0.0
    %566 = vmatpush1.msra.mxu0 0.0
    %567 = vmatprep.subr.mxu0 0.0
    %568 = vmatpush1.msra.mxu0 0.0
    %569 = vmatprep.subr.mxu0 0.0
    %570 = vmatpush1.msra.mxu0 0.0
    %571 = vmatprep.subr.mxu0 0.0
    %572 = vmatpush1.msra.mxu0 0.0
    %573 = vmatprep.subr.mxu0 0.0
    %574 = vmatpush1.msra.mxu0 0.0
    %575 = vmatprep.subr.mxu0 0.0
    %576 = vmatpush1.msra.mxu0 0.0
    %577 = vmatprep.subr.mxu0 0.0
    %578 = vmatpush1.msra.mxu0 0.0
    %579 = vmatprep.subr.mxu0 0.0
    %580 = vmatpush1.msra.mxu0 0.0
    %581 = vmatprep.subr.mxu0 0.0
    %582 = vmatpush1.msra.mxu0 0.0
    %583 = vmatprep.mubr.f32.mxu0 0.0
    %584 = vmatmul.mubr.f32.gmra.mrb[0].mxu0 %v518
    %v585 = vpop.f32.mrb[0].mxu0
    %v586 = vadd.f32 0.0, %v585
    %v587 = vpop.f32.mrb[0].mxu0
    %588 = vdwg.mxu0
    %v589 = vadd.f32 %v197, %v586
    %v590 = vtanh.pop %v589
    %591 = vmatprep.subr.mxu0 0.0
    %592 = vmatpush1.msra.mxu0 %v215
    %593 = vmatprep.subr.mxu0 0.0
    %594 = vmatpush1.msra.mxu0 %v216
    %595 = vmatprep.subr.mxu0 0.0
    %596 = vmatpush1.msra.mxu0 %v217
    %597 = vmatprep.subr.mxu0 0.0
    %598 = vmatpush1.msra.mxu0 %v218
    %599 = vmatprep.subr.mxu0 0.0
    %600 = vmatpush1.msra.mxu0 %v219
    %601 = vmatprep.subr.mxu0 0.0
    %602 = vmatpush1.msra.mxu0 %v220
    %603 = vmatprep.subr.mxu0 0.0
    %604 = vmatpush1.msra.mxu0 %v221
    %605 = vmatprep.subr.mxu0 0.0
    %606 = vmatpush1.msra.mxu0 %v222
    %607 = vmatprep.subr.mxu0 0.0
    %608 = vmatpush1.msra.mxu0 %v223
    %609 = vmatprep.subr.mxu0 0.0
    %610 = vmatpush1.msra.mxu0 %v224
    %611 = vmatprep.subr.mxu0 0.0
    %612 = vmatpush1.msra.mxu0 %v225
    %613 = vmatprep.subr.mxu0 0.0
    %614 = vmatpush1.msra.mxu0 %v226
    %615 = vmatprep.subr.mxu0 0.0
    %616 = vmatpush1.msra.mxu0 %v227
    %617 = vmatprep.subr.mxu0 0.0
    %618 = vmatpush1.msra.mxu0 %v228
    %619 = vmatprep.subr.mxu0 0.0
    %620 = vmatpush1.msra.mxu0 %v229
    %621 = vmatprep.subr.mxu0 0.0
    %622 = vmatpush1.msra.mxu0 %v230
    %623 = vmatprep.subr.mxu0 0.0
    %624 = vmatpush1.msra.mxu0 0.0
    %625 = vmatprep.subr.mxu0 0.0
    %626 = vmatpush1.msra.mxu0 0.0
    %627 = vmatprep.subr.mxu0 0.0
    %628 = vmatpush1.msra.mxu0 0.0
    %629 = vmatprep.subr.mxu0 0.0
    %630 = vmatpush1.msra.mxu0 0.0
    %631 = vmatprep.subr.mxu0 0.0
    %632 = vmatpush1.msra.mxu0 0.0
    %633 = vmatprep.subr.mxu0 0.0
    %634 = vmatpush1.msra.mxu0 0.0
    %635 = vmatprep.subr.mxu0 0.0
    %636 = vmatpush1.msra.mxu0 0.0
    %637 = vmatprep.subr.mxu0 0.0
    %638 = vmatpush1.msra.mxu0 0.0
    %639 = vmatprep.subr.mxu0 0.0
    %640 = vmatpush1.msra.mxu0 0.0
    %641 = vmatprep.subr.mxu0 0.0
    %642 = vmatpush1.msra.mxu0 0.0
    %643 = vmatprep.subr.mxu0 0.0
    %644 = vmatpush1.msra.mxu0 0.0
    %645 = vmatprep.subr.mxu0 0.0
    %646 = vmatpush1.msra.mxu0 0.0
    %647 = vmatprep.subr.mxu0 0.0
    %648 = vmatpush1.msra.mxu0 0.0
    %649 = vmatprep.subr.mxu0 0.0
    %650 = vmatpush1.msra.mxu0 0.0
    %651 = vmatprep.subr.mxu0 0.0
    %652 = vmatpush1.msra.mxu0 0.0
    %653 = vmatprep.subr.mxu0 0.0
    %654 = vmatpush1.msra.mxu0 0.0
    %655 = vmatprep.mubr.f32.mxu0 0.0
    %656 = vmatmul.mubr.f32.gmra.mrb[0].mxu0 %v590
    %v657 = vpop.f32.mrb[0].mxu0
    %v658 = vadd.f32 0.0, %v657
    %v659 = vpop.f32.mrb[0].mxu0
    %660 = vdwg.mxu0
    %v661 = vadd.f32 %v202, %v658
    %v662 = vtanh.pop %v661
    %663 = vmatprep.subr.mxu0 0.0
    %664 = vmatpush1.msra.mxu0 %v215
    %665 = vmatprep.subr.mxu0 0.0
    %666 = vmatpush1.msra.mxu0 %v216
    %667 = vmatprep.subr.mxu0 0.0
    %668 = vmatpush1.msra.mxu0 %v217
    %669 = vmatprep.subr.mxu0 0.0
    %670 = vmatpush1.msra.mxu0 %v218
    %671 = vmatprep.subr.mxu0 0.0
    %672 = vmatpush1.msra.mxu0 %v219
    %673 = vmatprep.subr.mxu0 0.0
    %674 = vmatpush1.msra.mxu0 %v220
    %675 = vmatprep.subr.mxu0 0.0
    %676 = vmatpush1.msra.mxu0 %v221
    %677 = vmatprep.subr.mxu0 0.0
    %678 = vmatpush1.msra.mxu0 %v222
    %679 = vmatprep.subr.mxu0 0.0
    %680 = vmatpush1.msra.mxu0 %v223
    %681 = vmatprep.subr.mxu0 0.0
    %682 = vmatpush1.msra.mxu0 %v224
    %683 = vmatprep.subr.mxu0 0.0
    %684 = vmatpush1.msra.mxu0 %v225
    %685 = vmatprep.subr.mxu0 0.0
    %686 = vmatpush1.msra.mxu0 %v226
    %687 = vmatprep.subr.mxu0 0.0
    %688 = vmatpush1.msra.mxu0 %v227
    %689 = vmatprep.subr.mxu0 0.0
    %690 = vmatpush1.msra.mxu0 %v228
    %691 = vmatprep.subr.mxu0 0.0
    %692 = vmatpush1.msra.mxu0 %v229
    %693 = vmatprep.subr.mxu0 0.0
    %694 = vmatpush1.msra.mxu0 %v230
    %695 = vmatprep.subr.mxu0 0.0
    %696 = vmatpush1.msra.mxu0 0.0
    %697 = vmatprep.subr.mxu0 0.0
    %698 = vmatpush1.msra.mxu0 0.0
    %699 = vmatprep.subr.mxu0 0.0
    %700 = vmatpush1.msra.mxu0 0.0
    %701 = vmatprep.subr.mxu0 0.0
    %702 = vmatpush1.msra.mxu0 0.0
    %703 = vmatprep.subr.mxu0 0.0
    %704 = vmatpush1.msra.mxu0 0.0
    %705 = vmatprep.subr.mxu0 0.0
    %706 = vmatpush1.msra.mxu0 0.0
    %707 = vmatprep.subr.mxu0 0.0
    %708 = vmatpush1.msra.mxu0 0.0
    %709 = vmatprep.subr.mxu0 0.0
    %710 = vmatpush1.msra.mxu0 0.0
    %711 = vmatprep.subr.mxu0 0.0
    %712 = vmatpush1.msra.mxu0 0.0
    %713 = vmatprep.subr.mxu0 0.0
    %714 = vmatpush1.msra.mxu0 0.0
    %715 = vmatprep.subr.mxu0 0.0
    %716 = vmatpush1.msra.mxu0 0.0
    %717 = vmatprep.subr.mxu0 0.0
    %718 = vmatpush1.msra.mxu0 0.0
    %719 = vmatprep.subr.mxu0 0.0
    %720 = vmatpush1.msra.mxu0 0.0
    %721 = vmatprep.subr.mxu0 0.0
    %722 = vmatpush1.msra.mxu0 0.0
    %723 = vmatprep.subr.mxu0 0.0
    %724 = vmatpush1.msra.mxu0 0.0
    %725 = vmatprep.subr.mxu0 0.0
    %726 = vmatpush1.msra.mxu0 0.0
    %727 = vmatprep.mubr.f32.mxu0 0.0
    %728 = vmatmul.mubr.f32.gmra.mrb[0].mxu0 %v662
    %v729 = vpop.f32.mrb[0].mxu0
    %v730 = vadd.f32 0.0, %v729
    %v731 = vpop.f32.mrb[0].mxu0
    %732 = vdwg.mxu0
    %v733 = vadd.f32 %v207, %v730
    %v734 = vtanh.pop %v733
    %735 = vmatprep.subr.mxu0 0.0
    %736 = vmatpush1.msra.mxu0 %v215
    %737 = vmatprep.subr.mxu0 0.0
    %738 = vmatpush1.msra.mxu0 %v216
    %739 = vmatprep.subr.mxu0 0.0
    %740 = vmatpush1.msra.mxu0 %v217
    %741 = vmatprep.subr.mxu0 0.0
    %742 = vmatpush1.msra.mxu0 %v218
    %743 = vmatprep.subr.mxu0 0.0
    %744 = vmatpush1.msra.mxu0 %v219
    %745 = vmatprep.subr.mxu0 0.0
    %746 = vmatpush1.msra.mxu0 %v220
    %747 = vmatprep.subr.mxu0 0.0
    %748 = vmatpush1.msra.mxu0 %v221
    %749 = vmatprep.subr.mxu0 0.0
    %750 = vmatpush1.msra.mxu0 %v222
    %751 = vmatprep.subr.mxu0 0.0
    %752 = vmatpush1.msra.mxu0 %v223
    %753 = vmatprep.subr.mxu0 0.0
    %754 = vmatpush1.msra.mxu0 %v224
    %755 = vmatprep.subr.mxu0 0.0
    %756 = vmatpush1.msra.mxu0 %v225
    %757 = vmatprep.subr.mxu0 0.0
    %758 = vmatpush1.msra.mxu0 %v226
    %759 = vmatprep.subr.mxu0 0.0
    %760 = vmatpush1.msra.mxu0 %v227
    %761 = vmatprep.subr.mxu0 0.0
    %762 = vmatpush1.msra.mxu0 %v228
    %763 = vmatprep.subr.mxu0 0.0
    %764 = vmatpush1.msra.mxu0 %v229
    %765 = vmatprep.subr.mxu0 0.0
    %766 = vmatpush1.msra.mxu0 %v230
    %767 = vmatprep.subr.mxu0 0.0
    %768 = vmatpush1.msra.mxu0 0.0
    %769 = vmatprep.subr.mxu0 0.0
    %770 = vmatpush1.msra.mxu0 0.0
    %771 = vmatprep.subr.mxu0 0.0
    %772 = vmatpush1.msra.mxu0 0.0
    %773 = vmatprep.subr.mxu0 0.0
    %774 = vmatpush1.msra.mxu0 0.0
    %775 = vmatprep.subr.mxu0 0.0
    %776 = vmatpush1.msra.mxu0 0.0
    %777 = vmatprep.subr.mxu0 0.0
    %778 = vmatpush1.msra.mxu0 0.0
    %779 = vmatprep.subr.mxu0 0.0
    %780 = vmatpush1.msra.mxu0 0.0
    %781 = vmatprep.subr.mxu0 0.0
    %782 = vmatpush1.msra.mxu0 0.0
    %783 = vmatprep.subr.mxu0 0.0
    %784 = vmatpush1.msra.mxu0 0.0
    %785 = vmatprep.subr.mxu0 0.0
    %786 = vmatpush1.msra.mxu0 0.0
    %787 = vmatprep.subr.mxu0 0.0
    %788 = vmatpush1.msra.mxu0 0.0
    %789 = vmatprep.subr.mxu0 0.0
    %790 = vmatpush1.msra.mxu0 0.0
    %791 = vmatprep.subr.mxu0 0.0
    %792 = vmatpush1.msra.mxu0 0.0
    %793 = vmatprep.subr.mxu0 0.0
    %794 = vmatpush1.msra.mxu0 0.0
    %795 = vmatprep.subr.mxu0 0.0
    %796 = vmatpush1.msra.mxu0 0.0
    %797 = vmatprep.subr.mxu0 0.0
    %798 = vmatpush1.msra.mxu0 0.0
    %799 = vmatprep.mubr.f32.mxu0 0.0
    %800 = vmatmul.mubr.f32.gmra.mrb[0].mxu0 %v734
    %v801 = vpop.f32.mrb[0].mxu0
    %v802 = vadd.f32 0.0, %v801
    %v803 = vpop.f32.mrb[0].mxu0
    %804 = vdwg.mxu0
    %v805 = vadd.f32 %v212, %v802
    %v806 = vtanh.pop %v805
    %v807 = vld [vmem:[#allocation8] sm:$0xff]
    %v808 = vld [vmem:[#allocation8 + $0x8] sm:$0xff]
    %v809 = vld [vmem:[#allocation8 + $0x10] sm:$0xff]
    %v810 = vld [vmem:[#allocation8 + $0x18] sm:$0xff]
    %v811 = vld [vmem:[#allocation8 + $0x20] sm:$0xff]
    %v812 = vld [vmem:[#allocation8 + $0x28] sm:$0xff]
    %v813 = vld [vmem:[#allocation8 + $0x30] sm:$0xff]
    %v814 = vld [vmem:[#allocation8 + $0x38] sm:$0xff]
    %v815 = vld [vmem:[#allocation8 + $0x40] sm:$0xff]
    %v816 = vld [vmem:[#allocation8 + $0x48] sm:$0xff]
    %v817 = vld [vmem:[#allocation8 + $0x50] sm:$0xff]
    %v818 = vld [vmem:[#allocation8 + $0x58] sm:$0xff]
    %v819 = vld [vmem:[#allocation8 + $0x60] sm:$0xff]
    %v820 = vld [vmem:[#allocation8 + $0x68] sm:$0xff]
    %v821 = vld [vmem:[#allocation8 + $0x70] sm:$0xff]
    %v822 = vld [vmem:[#allocation8 + $0x78] sm:$0xff]
    %v823 = vld [vmem:[%s5] sm:$0x1]
    %v825 = vlaneseq
    %v826 = vshrl.u32 %v825, 7
    %v827 = vsub.s32 0, %v826
    %v828 = vrot.slane %v823, %v827
    %830 = vmatprep.subr.mxu0 0.0
    %831 = vmatpush1.msra.mxu0 %v807
    %832 = vmatprep.subr.mxu0 0.0
    %833 = vmatpush1.msra.mxu0 %v808
    %834 = vmatprep.subr.mxu0 0.0
    %835 = vmatpush1.msra.mxu0 %v809
    %836 = vmatprep.subr.mxu0 0.0
    %837 = vmatpush1.msra.mxu0 %v810
    %838 = vmatprep.subr.mxu0 0.0
    %839 = vmatpush1.msra.mxu0 %v811
    %840 = vmatprep.subr.mxu0 0.0
    %841 = vmatpush1.msra.mxu0 %v812
    %842 = vmatprep.subr.mxu0 0.0
    %843 = vmatpush1.msra.mxu0 %v813
    %844 = vmatprep.subr.mxu0 0.0
    %845 = vmatpush1.msra.mxu0 %v814
    %846 = vmatprep.subr.mxu0 0.0
    %847 = vmatpush1.msra.mxu0 %v815
    %848 = vmatprep.subr.mxu0 0.0
    %849 = vmatpush1.msra.mxu0 %v816
    %850 = vmatprep.subr.mxu0 0.0
    %851 = vmatpush1.msra.mxu0 %v817
    %852 = vmatprep.subr.mxu0 0.0
    %853 = vmatpush1.msra.mxu0 %v818
    %854 = vmatprep.subr.mxu0 0.0
    %855 = vmatpush1.msra.mxu0 %v819
    %856 = vmatprep.subr.mxu0 0.0
    %857 = vmatpush1.msra.mxu0 %v820
    %858 = vmatprep.subr.mxu0 0.0
    %859 = vmatpush1.msra.mxu0 %v821
    %860 = vmatprep.subr.mxu0 0.0
    %861 = vmatpush1.msra.mxu0 %v822
    %862 = vmatprep.subr.mxu0 0.0
    %863 = vmatpush1.msra.mxu0 0.0
    %864 = vmatprep.subr.mxu0 0.0
    %865 = vmatpush1.msra.mxu0 0.0
    %866 = vmatprep.subr.mxu0 0.0
    %867 = vmatpush1.msra.mxu0 0.0
    %868 = vmatprep.subr.mxu0 0.0
    %869 = vmatpush1.msra.mxu0 0.0
    %870 = vmatprep.subr.mxu0 0.0
    %871 = vmatpush1.msra.mxu0 0.0
    %872 = vmatprep.subr.mxu0 0.0
    %873 = vmatpush1.msra.mxu0 0.0
    %874 = vmatprep.subr.mxu0 0.0
    %875 = vmatpush1.msra.mxu0 0.0
    %876 = vmatprep.subr.mxu0 0.0
    %877 = vmatpush1.msra.mxu0 0.0
    %878 = vmatprep.subr.mxu0 0.0
    %879 = vmatpush1.msra.mxu0 0.0
    %880 = vmatprep.subr.mxu0 0.0
    %881 = vmatpush1.msra.mxu0 0.0
    %882 = vmatprep.subr.mxu0 0.0
    %883 = vmatpush1.msra.mxu0 0.0
    %884 = vmatprep.subr.mxu0 0.0
    %885 = vmatpush1.msra.mxu0 0.0
    %886 = vmatprep.subr.mxu0 0.0
    %887 = vmatpush1.msra.mxu0 0.0
    %888 = vmatprep.subr.mxu0 0.0
    %889 = vmatpush1.msra.mxu0 0.0
    %890 = vmatprep.subr.mxu0 0.0
    %891 = vmatpush1.msra.mxu0 0.0
    %892 = vmatprep.subr.mxu0 0.0
    %893 = vmatpush1.msra.mxu0 0.0
    %894 = vmatprep.mubr.f32.mxu0 0.0
    %895 = vmatmul.mubr.f32.gmra.mrb[0].mxu0 %v302
    %v896 = vpop.f32.mrb[0].mxu0
    %v897 = vadd.f32 %v828, %v896
    %v898 = vpop.f32.mrb[0].mxu0
    %899 = vmatprep.mubr.f32.mxu0 0.0
    %900 = vmatmul.mubr.f32.gmra.mrb[0].mxu0 %v374
    %v901 = vpop.f32.mrb[0].mxu0
    %v902 = vadd.f32 %v828, %v901
    %v903 = vpop.f32.mrb[0].mxu0
    %904 = vmatprep.mubr.f32.mxu0 0.0
    %905 = vmatmul.mubr.f32.gmra.mrb[0].mxu0 %v446
    %v906 = vpop.f32.mrb[0].mxu0
    %v907 = vadd.f32 %v828, %v906
    %v908 = vpop.f32.mrb[0].mxu0
    %909 = vmatprep.mubr.f32.mxu0 0.0
    %910 = vmatmul.mubr.f32.gmra.mrb[0].mxu0 %v518
    %v911 = vpop.f32.mrb[0].mxu0
    %v912 = vadd.f32 %v828, %v911
    %v913 = vpop.f32.mrb[0].mxu0
    %914 = vmatprep.mubr.f32.mxu0 0.0
    %915 = vmatmul.mubr.f32.gmra.mrb[0].mxu0 %v590
    %v916 = vpop.f32.mrb[0].mxu0
    %v917 = vadd.f32 %v828, %v916
    %v918 = vpop.f32.mrb[0].mxu0
    %919 = vmatprep.mubr.f32.mxu0 0.0
    %920 = vmatmul.mubr.f32.gmra.mrb[0].mxu0 %v662
    %v921 = vpop.f32.mrb[0].mxu0
    %v922 = vadd.f32 %v828, %v921
    %v923 = vpop.f32.mrb[0].mxu0
    %924 = vmatprep.mubr.f32.mxu0 0.0
    %925 = vmatmul.mubr.f32.gmra.mrb[0].mxu0 %v734
    %v926 = vpop.f32.mrb[0].mxu0
    %v927 = vadd.f32 %v828, %v926
    %v928 = vpop.f32.mrb[0].mxu0
    %929 = vmatprep.mubr.f32.mxu0 0.0
    %930 = vmatmul.mubr.f32.gmra.mrb[0].mxu0 %v806
    %v931 = vpop.f32.mrb[0].mxu0
    %v932 = vadd.f32 %v828, %v931
    %v933 = vpop.f32.mrb[0].mxu0
    %934 = vdwg.mxu0
    %935 = vst [vmem:[#allocation10] sm:$0xff] %v897
    %936 = vst [vmem:[#allocation10 + $0x8] sm:$0xff] %v902
    %937 = vst [vmem:[#allocation10 + $0x10] sm:$0xff] %v907
    %938 = vst [vmem:[#allocation10 + $0x18] sm:$0xff] %v912
    %939 = vst [vmem:[#allocation10 + $0x20] sm:$0xff] %v917
    %940 = vst [vmem:[#allocation10 + $0x28] sm:$0xff] %v922
    %941 = vst [vmem:[#allocation10 + $0x30] sm:$0xff] %v927
    %942 = vst [vmem:[#allocation10 + $0x38] sm:$0xff] %v932
    // Predicated region
    $region42: #{tpu_custom_call.1} parent=1 // pred_check
      _
    $region43: #{tpu_custom_call.1} parent=1 // pred_check_branch
      %944 = sbr.rel (0) target = $region45
    $region44: #{tpu_custom_call.1} parent=1 // pred_region
      %s946 = ssub.s32 1024, 1024
      %947 = vsyncadd [#allocation4], %s946
      %s948 = sshll.u32 [#allocation10], 4
      %s949 = int_to_ptr.vmem [resolvable:$true] %s948
      %954 = dma.vmem_to_hbm [thread:$0]  %s949, 1024, %s6, [#allocation4], 128, 128, 8
    $region45: #{tpu_custom_call.1} parent=1 // pred_fallthru
      _
    // Predicated region
    $region46: #{tpu_custom_call.1} parent=1 // pred_check
      _
    $region47: #{tpu_custom_call.1} parent=1 // pred_check_branch
      %956 = sbr.rel (0) target = $region49
    $region48: #{tpu_custom_call.1} parent=1 // pred_region
      %957 = dma.done [#allocation4], 1024
    $region49: #{tpu_custom_call.1} parent=1 // pred_fallthru
      _
    %958 = vsyncpa [#allocation3], 1
    %959 = vsyncpa [#allocation6], 1
    %960 = vsyncpa [#allocation9], 1
    %961 = vsyncpa [#allocation4], 1

</llo_original>
